<compile_context>
chip_gen: v7x
topology: tpu7x:2x2x1
jax: 0.10.0
libtpu: 0.0.40
codegen_flags: <defaults>
</compile_context>

<pallas_src>
import functools
import math

import jax
import jax.numpy as jnp
from jax.experimental import pallas as pl
from jax.experimental.pallas import tpu as pltpu


# ---------------------------------------------------------------------------
# Kernel
# ---------------------------------------------------------------------------
def _actor_critic_kernel(x_ref, w1_ref, w2_ref, b_ref, out_ref):
    """Fused two-head MLP: 2 MXU matmuls + VPU bias/ReLU, one lane-dense output slab."""
    h2p = w1_ref.shape[1]                       # padded 2*hidden (static)
    exact_f32 = w1_ref.dtype == jnp.float32     # static branch (trace time)
    prec = jax.lax.Precision.HIGHEST if exact_f32 else None

    x = x_ref[...]                                                     # [TB, D]

    # Layer 1 (both heads fused): [TB, D] @ [D, 2Hp] -> [TB, 2Hp], f32 accumulate
    h = jnp.dot(x, w1_ref[...], preferred_element_type=jnp.float32, precision=prec)
    h = jnp.maximum(h + b_ref[:, :h2p], 0.0)                           # bias + ReLU

    if not exact_f32:
        h = h.astype(w1_ref.dtype)                                     # bf16 MXU operand

    # Layer 2 (block-diagonal fuse): [TB, 2Hp] @ [2Hp, OUTp] -> [TB, OUTp]
    out = jnp.dot(h, w2_ref[...], preferred_element_type=jnp.float32, precision=prec)
    out = out + b_ref[:, h2p:]                                         # packed b2

    out_ref[...] = out.astype(out_ref.dtype)                           # lane-dense store


# ---------------------------------------------------------------------------
# Tiling helpers
# ---------------------------------------------------------------------------
def _round_up(x, m):
    return ((x + m - 1) // m) * m


def _default_tile_cap():
    """Per-generation batch-tile cap (per perf review): v5e/v6e ~1024, v7x 2048-4096."""
    try:
        kind = jax.devices()[0].device_kind.lower()
    except Exception:  # pragma: no cover
        return 2048
    if "v5" in kind or "v6" in kind:
        return 1024
    return 4096  # v7x and newer: bigger tiles to feed 3.2 TB/s HBM + 2 TCs


def _choose_tiling(batch, tb_max):
    """Pick (tile, num_blocks, padded_batch).

    - tile rows are a multiple of 8 (sublane alignment); batch is padded to a
      tile multiple so there is no whole-batch / tiny-tile fallback.
    - any batch > 8 gets at least 2 grid steps so 'parallel' semantics can
      shard across both v7x TensorCores.
    """
    if batch <= 8:
        tb = _round_up(max(batch, 1), 8)
    else:
        tb = min(tb_max, _round_up(-(-batch // 2), 8))
    nblocks = -(-batch // tb)
    padded = nblocks * tb
    return tb, nblocks, padded


# ---------------------------------------------------------------------------
# Wrapper
# ---------------------------------------------------------------------------
@functools.partial(jax.jit, static_argnames=("num_outputs",))
def actor_critic_forward(x, packed, *, num_outputs):
    """Returns (acts, value) just like ActorCritic.forward (f32 outputs)."""
    B, D = x.shape
    w1 = packed["w1"]       # [D, 2Hp]         (bf16 or f32)
    w2 = packed["w2"]       # [2Hp, OUTp]      (bf16 or f32)
    bias = packed["bias"]   # [1, 2Hp + OUTp]  (f32)
    h2p = w1.shape[1]
    outp = w2.shape[1]
    wdtype = w1.dtype

    tb, nblocks, padded = _choose_tiling(B, _default_tile_cap())

    # Cast x to the compute dtype (halves the input DMA in the bf16 path) and
    # pad the batch up to a tile multiple; padded rows are sliced away below.
    xk = x.astype(wdtype)
    if padded != B:
        xk = jnp.zeros((padded, D), wdtype).at[:B].set(xk)

    out = pl.pallas_call(
        _actor_critic_kernel,
        out_shape=jax.ShapeDtypeStruct((padded, outp), wdtype),
        grid=(nblocks,),
        in_specs=[
            # x: tiled over batch, double-buffered (default) for DMA/compute overlap
            pl.BlockSpec((tb, D), lambda i: (i, 0)),
            # weights / biases: constant index_map -> VMEM-resident, single-buffered
            pl.BlockSpec((D, h2p), lambda i: (0, 0),
                         pipeline_mode=pl.Buffered(1)),
            pl.BlockSpec((h2p, outp), lambda i: (0, 0),
                         pipeline_mode=pl.Buffered(1)),
            pl.BlockSpec((1, h2p + outp), lambda i: (0, 0),
                         pipeline_mode=pl.Buffered(1)),
        ],
        out_specs=pl.BlockSpec((tb, outp), lambda i: (i, 0)),  # lane-dense slab
        compiler_params=pltpu.CompilerParams(
            dimension_semantics=("parallel",),                 # megacore sharding on v7x
        ),
    )(xk, w1, w2, bias)

    acts = out[:B, :num_outputs].astype(jnp.float32)                    # [B, A]
    value = out[:B, num_outputs:num_outputs + 1].astype(jnp.float32)    # [B, 1]
    return acts, value


# ---------------------------------------------------------------------------
# Parameter init / packing
# ---------------------------------------------------------------------------
def init_params(key, num_inputs, num_outputs, hidden_size):
    """PyTorch nn.Linear-style init U(-1/sqrt(fan_in), 1/sqrt(fan_in)).
    Weights stored transposed ([in, out]); biases as [1, out]."""
    keys = jax.random.split(key, 8)

    def lin(kw, kb, fan_in, fan_out):
        bound = 1.0 / math.sqrt(fan_in)
        w = jax.random.uniform(kw, (fan_in, fan_out), jnp.float32, -bound, bound)
        b = jax.random.uniform(kb, (1, fan_out), jnp.float32, -bound, bound)
        return w, b

    w1a, b1a = lin(keys[0], keys[1], num_inputs, hidden_size)
    w2a, b2a = lin(keys[2], keys[3], hidden_size, num_outputs)
    w1c, b1c = lin(keys[4], keys[5], num_inputs, hidden_size)
    w2c, b2c = lin(keys[6], keys[7], hidden_size, 1)
    return dict(w1a=w1a, b1a=b1a, w2a=w2a, b2a=b2a,
                w1c=w1c, b1c=b1c, w2c=w2c, b2c=b2c)


def pack_params(p, dtype=jnp.bfloat16):
    """Fuse + lane-pad parameters for the kernel.

    W1  = [D, 2Hp]          : [w1a | w1c | 0-pad]                       (dtype)
    W2  = [2Hp, OUTp]       : block-diag( w2a -> cols [0,A), w2c -> A ) (dtype)
    bias= [1, 2Hp + OUTp]   : [b1a | b1c | 0 | b2a | b2c | 0]           (f32)

    dtype=jnp.bfloat16 (default, fast): halves weight VMEM/DMA, f32 accumulation.
    dtype=jnp.float32: exact-f32 path (kernel uses precision=HIGHEST).
    """
    D, H = p["w1a"].shape
    A = p["w2a"].shape[1]
    H2 = 2 * H
    H2p = _round_up(H2, 128)
    OUT = A + 1
    OUTp = _round_up(OUT, 128)

    w1 = jnp.zeros((D, H2p), jnp.float32)
    w1 = w1.at[:, :H].set(p["w1a"]).at[:, H:H2].set(p["w1c"])

    w2 = jnp.zeros((H2p, OUTp), jnp.float32)
    w2 = w2.at[:H, :A].set(p["w2a"]).at[H:H2, A:A + 1].set(p["w2c"])

    bias = jnp.zeros((1, H2p + OUTp), jnp.float32)
    bias = bias.at[:, :H].set(p["b1a"]).at[:, H:H2].set(p["b1c"])
    bias = bias.at[:, H2p:H2p + A].set(p["b2a"])
    bias = bias.at[:, H2p + A:H2p + A + 1].set(p["b2c"])

    return dict(w1=w1.astype(dtype), w2=w2.astype(dtype), bias=bias)


# ---------------------------------------------------------------------------
# Reference + test
# ---------------------------------------------------------------------------
def _reference_forward(x, p):
    """Pure-JAX reference matching the PyTorch fp32 module (exact f32 matmuls)."""
    hi = jax.lax.Precision.HIGHEST
    ha = jnp.maximum(jnp.dot(x, p["w1a"], precision=hi) + p["b1a"], 0.0)
    acts = jnp.dot(ha, p["w2a"], precision=hi) + p["b2a"]
    hc = jnp.maximum(jnp.dot(x, p["w1c"], precision=hi) + p["b1c"], 0.0)
    value = jnp.dot(hc, p["w2c"], precision=hi) + p["b2c"]
    return acts, value


if __name__ == "__main__":
    # Small shapes consistent with the module: observations of dim 16,
    # 4 discrete actions, hidden width 32.
    batch, num_inputs, num_outputs, hidden_size = 8, 16, 4, 32

    key = jax.random.PRNGKey(0)
    k_x, k_p, k_x2 = jax.random.split(key, 3)
    x = jax.random.normal(k_x, (batch, num_inputs), jnp.float32)
    params = init_params(k_p, num_inputs, num_outputs, hidden_size)

    ref_acts, ref_value = _reference_forward(x, params)

    # --- default bf16 fast path ---------------------------------------------
    packed_bf16 = pack_params(params, dtype=jnp.bfloat16)
    acts, value = actor_critic_forward(x, packed_bf16, num_outputs=num_outputs)
    jax.block_until_ready((acts, value))
    assert acts.shape == (batch, num_outputs)
    assert value.shape == (batch, 1)
    assert jnp.allclose(acts, ref_acts, atol=2e-2, rtol=2e-2)
    assert jnp.allclose(value, ref_value, atol=2e-2, rtol=2e-2)

    # --- non-multiple-of-8 batch exercises pad + >=2-grid-step path ----------
    x2 = jax.random.normal(k_x2, (100, num_inputs), jnp.float32)
    acts2, value2 = actor_critic_forward(x2, packed_bf16, num_outputs=num_outputs)
    jax.block_until_ready((acts2, value2))
    ref_acts2, ref_value2 = _reference_forward(x2, params)
    assert acts2.shape == (100, num_outputs)
    assert value2.shape == (100, 1)
    assert jnp.allclose(acts2, ref_acts2, atol=2e-2, rtol=2e-2)
    assert jnp.allclose(value2, ref_value2, atol=2e-2, rtol=2e-2)

    # --- exact fp32 path (precision=HIGHEST) for strict parity ---------------
    packed_f32 = pack_params(params, dtype=jnp.float32)
    acts3, value3 = actor_critic_forward(x, packed_f32, num_outputs=num_outputs)
    jax.block_until_ready((acts3, value3))
    assert jnp.allclose(acts3, ref_acts, atol=1e-5, rtol=1e-5)
    assert jnp.allclose(value3, ref_value, atol=1e-5, rtol=1e-5)

    print("KERNEL_OK")
</pallas_src>

<mosaic_0001>
module attributes {stable_mosaic.version = 11 : i64} {
  func.func @_actor_critic_kernel(%arg0: i32, %arg1: memref<8x16xbf16, #tpu.memory_space<vmem>>, %arg2: memref<16x128xbf16, #tpu.memory_space<vmem>>, %arg3: memref<128x128xbf16, #tpu.memory_space<vmem>>, %arg4: memref<1x256xf32, #tpu.memory_space<vmem>>, %arg5: memref<8x128xbf16, #tpu.memory_space<vmem>>) attributes {dimension_semantics = [#tpu.dimension_semantics<parallel>], iteration_bounds = array<i64: 1>, scalar_prefetch = 0 : i64, scratch_operands = 0 : i64, tpu.core_type = #tpu.core_type<tc>, window_params = [{transform_indices = @transform_0, window_bounds = array<i64: 8, 16>}, {pipeline_mode = #tpu.pipeline_mode<synchronous>, transform_indices = @transform_1, window_bounds = array<i64: 16, 128>}, {pipeline_mode = #tpu.pipeline_mode<synchronous>, transform_indices = @transform_2, window_bounds = array<i64: 128, 128>}, {pipeline_mode = #tpu.pipeline_mode<synchronous>, transform_indices = @transform_3, window_bounds = array<i64: 1, 256>}, {transform_indices = @transform_4, window_bounds = array<i64: 8, 128>}]} {
    %c0 = arith.constant 0 : index
    %c0_0 = arith.constant 0 : index
    %0 = vector.load %arg1[%c0, %c0_0] : memref<8x16xbf16, #tpu.memory_space<vmem>>, vector<8x16xbf16>
    %c0_1 = arith.constant 0 : index
    %c0_2 = arith.constant 0 : index
    %1 = vector.load %arg2[%c0_1, %c0_2] : memref<16x128xbf16, #tpu.memory_space<vmem>>, vector<16x128xbf16>
    %cst = arith.constant dense<0.000000e+00> : vector<8x128xf32>
    %2 = tpu.matmul %0, %1, %cst {dimension_numbers = #tpu.dot_dimension_numbers<[1], [0], [0], [1], [0, 0, 1, 1], [], []>} : vector<8x16xbf16>, vector<16x128xbf16>, vector<8x128xf32> -> vector<8x128xf32>
    %c0_3 = arith.constant 0 : index
    %c0_4 = arith.constant 0 : index
    %3 = vector.load %arg4[%c0_3, %c0_4] : memref<1x256xf32, #tpu.memory_space<vmem>>, vector<1x128xf32>
    %4 = vector.broadcast %3 : vector<1x128xf32> to vector<8x128xf32>
    %5 = arith.addf %2, %4 : vector<8x128xf32>
    %cst_5 = arith.constant 0.000000e+00 : f32
    %6 = vector.broadcast %cst_5 : f32 to vector<8x128xf32>
    %7 = arith.maximumf %5, %6 : vector<8x128xf32>
    %8 = arith.truncf %7 : vector<8x128xf32> to vector<8x128xbf16>
    %c0_6 = arith.constant 0 : index
    %c0_7 = arith.constant 0 : index
    %9 = vector.load %arg3[%c0_6, %c0_7] : memref<128x128xbf16, #tpu.memory_space<vmem>>, vector<128x128xbf16>
    %cst_8 = arith.constant dense<0.000000e+00> : vector<8x128xf32>
    %10 = tpu.matmul %8, %9, %cst_8 {dimension_numbers = #tpu.dot_dimension_numbers<[1], [0], [0], [1], [0, 0, 1, 1], [], []>} : vector<8x128xbf16>, vector<128x128xbf16>, vector<8x128xf32> -> vector<8x128xf32>
    %c0_9 = arith.constant 0 : index
    %c128 = arith.constant 128 : index
    %11 = vector.load %arg4[%c0_9, %c128] : memref<1x256xf32, #tpu.memory_space<vmem>>, vector<1x128xf32>
    %12 = vector.broadcast %11 : vector<1x128xf32> to vector<8x128xf32>
    %13 = arith.addf %10, %12 : vector<8x128xf32>
    %14 = arith.truncf %13 : vector<8x128xf32> to vector<8x128xbf16>
    %c0_10 = arith.constant 0 : index
    %c0_11 = arith.constant 0 : index
    %15 = vector.load %arg5[%c0_10, %c0_11] : memref<8x128xbf16, #tpu.memory_space<vmem>>, vector<8x128xbf16>
    tpu.vector_store %arg5[%c0_10, %c0_11], %14 {strides = array<i32>} : memref<8x128xbf16, #tpu.memory_space<vmem>>, vector<8x128xbf16>,
    return
  }
  func.func @transform_0(%arg0: i32) -> (i32, i32) {
    %c0_i32 = arith.constant 0 : i32
    %c0_i32_0 = arith.constant 0 : i32
    return %arg0, %c0_i32 : i32, i32
  }
  func.func @transform_1(%arg0: i32) -> (i32, i32) {
    %c0_i32 = arith.constant 0 : i32
    %c0_i32_0 = arith.constant 0 : i32
    %c0_i32_1 = arith.constant 0 : i32
    return %c0_i32, %c0_i32_0 : i32, i32
  }
  func.func @transform_2(%arg0: i32) -> (i32, i32) {
    %c0_i32 = arith.constant 0 : i32
    %c0_i32_0 = arith.constant 0 : i32
    %c0_i32_1 = arith.constant 0 : i32
    return %c0_i32, %c0_i32_0 : i32, i32
  }
  func.func @transform_3(%arg0: i32) -> (i32, i32) {
    %c0_i32 = arith.constant 0 : i32
    %c0_i32_0 = arith.constant 0 : i32
    %c0_i32_1 = arith.constant 0 : i32
    return %c0_i32, %c0_i32_0 : i32, i32
  }
  func.func @transform_4(%arg0: i32) -> (i32, i32) {
    %c0_i32 = arith.constant 0 : i32
    %c0_i32_0 = arith.constant 0 : i32
    return %arg0, %c0_i32 : i32, i32
  }
}

</mosaic_0001>

<llo_original>
// kernel: actor_critic_forward.1
$region0: #{actor_critic_forward.1}
  #allocation0 [shape = 'u32[]', space=smem, size = 0x4, offset = 0x4, fixed_abs, tag = 'smem constant byte address 0x4 - core index']
  #allocation1 [shape = 'u32[144,128]{1,0:T(1,128)}', space=vmem, size = 0x12000, scoped, tag = 'internal scratch']
  %s0 = inlined_call_operand.vmem [shape: bf16[8,16], index: 0, kind: input, shape index: {}]
  %s1 = inlined_call_operand.vmem [shape: bf16[16,128], index: 1, kind: input, shape index: {}]
  %s2 = inlined_call_operand.hbm [shape: bf16[128,128], index: 2, kind: input, shape index: {}]
  %s3 = inlined_call_operand.vmem [shape: f32[1,256], index: 3, kind: input, shape index: {}]
  %s4 = inlined_call_operand.vmem [shape: bf16[8,128], index: 4, kind: output, shape index: {}]
  %s5 = sld [smem:[#allocation0]]
  $region30: #{actor_critic_forward.1} parent=0
    _
  %s7 = ssub.s32 1, %s5
  %s8 = scalar_select 0, %s7, %s5
  $region1: #{actor_critic_forward.1} parent=0
    #allocation2 [shape = 'u8[32768]{0}', space=vmem, size = 0x8000, scoped, tag = 'input window, operand 2, single buffered']
    #allocation3 [shape = 's32[1]{0}', space=sflag, size = 0x4, scoped, tag = 'scoped memory for actor_critic_forward.1']
    %9 = vsyncpa [#allocation3], 0
    // Predicated region
    $region2: #{actor_critic_forward.1} parent=1 // pred_check
      _
    $region3: #{actor_critic_forward.1} parent=1 // pred_check_branch
      %11 = sbr.rel (0) target = $region5
    $region4: #{actor_critic_forward.1} parent=1 // pred_region
      _
    $region5: #{actor_critic_forward.1} parent=1 // pred_fallthru
      _
    // Predicated region
    $region6: #{actor_critic_forward.1} parent=1 // pred_check
      _
    $region7: #{actor_critic_forward.1} parent=1 // pred_check_branch
      %13 = sbr.rel (0) target = $region9
    $region8: #{actor_critic_forward.1} parent=1 // pred_region
      _
    $region9: #{actor_critic_forward.1} parent=1 // pred_fallthru
      _
    // Predicated region
    $region10: #{actor_critic_forward.1} parent=1 // pred_check
      _
    $region11: #{actor_critic_forward.1} parent=1 // pred_check_branch
      %15 = sbr.rel (0) target = $region13
    $region12: #{actor_critic_forward.1} parent=1 // pred_region
      %s17 = ssub.s32 1024, 1024
      %18 = vsyncadd [#allocation3], %s17
      %s19 = sshll.u32 [#allocation2], 4
      %s20 = int_to_ptr.vmem [resolvable:$true] %s19
      %25 = dma.hbm_to_vmem [thread:$0]  %s2, 1024, %s20, [#allocation3], 64, 64, 4
    $region13: #{actor_critic_forward.1} parent=1 // pred_fallthru
      _
    // Predicated region
    $region14: #{actor_critic_forward.1} parent=1 // pred_check
      _
    $region15: #{actor_critic_forward.1} parent=1 // pred_check_branch
      %27 = sbr.rel (0) target = $region17
    $region16: #{actor_critic_forward.1} parent=1 // pred_region
      _
    $region17: #{actor_critic_forward.1} parent=1 // pred_fallthru
      _
    // Predicated region
    $region18: #{actor_critic_forward.1} parent=1 // pred_check
      _
    $region19: #{actor_critic_forward.1} parent=1 // pred_check_branch
      %29 = sbr.rel (0) target = $region21
    $region20: #{actor_critic_forward.1} parent=1 // pred_region
      %30 = dma.done [#allocation3], 1024
    $region21: #{actor_critic_forward.1} parent=1 // pred_fallthru
      _
    %v32 = vld [vmem:[%s0] sm:$0xf]
    %v33 = vld [vmem:[%s1] sm:$0xf]
    %v34 = vld [vmem:[%s1 + $0x4] sm:$0xf]
    %v35 = vld [vmem:[%s3] sm:$0x1]
    %v37 = vlaneseq
    %v38 = vshrl.u32 %v37, 7
    %v39 = vsub.s32 0, %v38
    %v40 = vrot.slane %v35, %v39
    %v44 = vunpack.c.l.b16 %v33
    %v45 = vunpack.c.l.b16 %v34
    %v46 = vpack.c.b16 %v45, %v44
    %vm48 = vcmask 130048
    %v50 = vsel %vm48, %v32, 0
    %52 = vmatprep.subr.bf16.mxu0 0
    %53 = vmatpush1.bf16.msra.mxu0 %v46
    %54 = vmatprep.subr.bf16.mxu0 0
    %55 = vmatpush1.bf16.msra.mxu0 0
    %56 = vmatprep.subr.bf16.mxu0 0
    %57 = vmatpush1.bf16.msra.mxu0 0
    %58 = vmatprep.subr.bf16.mxu0 0
    %59 = vmatpush1.bf16.msra.mxu0 0
    %60 = vmatprep.subr.bf16.mxu0 0
    %61 = vmatpush1.bf16.msra.mxu0 0
    %62 = vmatprep.subr.bf16.mxu0 0
    %63 = vmatpush1.bf16.msra.mxu0 0
    %64 = vmatprep.subr.bf16.mxu0 0
    %65 = vmatpush1.bf16.msra.mxu0 0
    %66 = vmatprep.subr.bf16.mxu0 0
    %67 = vmatpush1.bf16.msra.mxu0 0
    %68 = vmatprep.subr.bf16.mxu0 0
    %69 = vmatpush1.bf16.msra.mxu0 0
    %70 = vmatprep.subr.bf16.mxu0 0
    %71 = vmatpush1.bf16.msra.mxu0 0
    %72 = vmatprep.subr.bf16.mxu0 0
    %73 = vmatpush1.bf16.msra.mxu0 0
    %74 = vmatprep.subr.bf16.mxu0 0
    %75 = vmatpush1.bf16.msra.mxu0 0
    %76 = vmatprep.subr.bf16.mxu0 0
    %77 = vmatpush1.bf16.msra.mxu0 0
    %78 = vmatprep.subr.bf16.mxu0 0
    %79 = vmatpush1.bf16.msra.mxu0 0
    %80 = vmatprep.subr.bf16.mxu0 0
    %81 = vmatpush1.bf16.msra.mxu0 0
    %82 = vmatprep.subr.bf16.mxu0 0
    %83 = vmatpush1.bf16.msra.mxu0 0
    %84 = vmatprep.mubr.bf16.mxu0 0
    %85 = vmatmul.mubr.bf16.gmra.mrb[0].mxu0 %v50
    %v86 = vpop.f32.mrb[0].mxu0
    %v87 = vadd.f32 %v40, %v86
    %v88 = vpop.f32.mrb[0].mxu0
    %v89 = vpop.f32.mrb[0].mxu0
    %v90 = vpop.f32.mrb[0].mxu0
    %91 = vdwg.mxu0
    %v92 = vmax.f32 %v87, 0.0
    %v93 = vpack.c.bf16 %v92, %v92
    %v94 = vld [vmem:[#allocation2] sm:$0xf]
    %v95 = vld [vmem:[#allocation2 + $0x4] sm:$0xf]
    %v96 = vld [vmem:[#allocation2 + $0x8] sm:$0xf]
    %v97 = vld [vmem:[#allocation2 + $0xc] sm:$0xf]
    %v98 = vld [vmem:[#allocation2 + $0x10] sm:$0xf]
    %v99 = vld [vmem:[#allocation2 + $0x14] sm:$0xf]
    %v100 = vld [vmem:[#allocation2 + $0x18] sm:$0xf]
    %v101 = vld [vmem:[#allocation2 + $0x1c] sm:$0xf]
    %v102 = vld [vmem:[#allocation2 + $0x20] sm:$0xf]
    %v103 = vld [vmem:[#allocation2 + $0x24] sm:$0xf]
    %v104 = vld [vmem:[#allocation2 + $0x28] sm:$0xf]
    %v105 = vld [vmem:[#allocation2 + $0x2c] sm:$0xf]
    %v106 = vld [vmem:[#allocation2 + $0x30] sm:$0xf]
    %v107 = vld [vmem:[#allocation2 + $0x34] sm:$0xf]
    %v108 = vld [vmem:[#allocation2 + $0x38] sm:$0xf]
    %v109 = vld [vmem:[#allocation2 + $0x3c] sm:$0xf]
    %v110 = vld [vmem:[%s3 + $0x1] sm:$0x1]
    %v112 = vlaneseq
    %v113 = vshrl.u32 %v112, 7
    %v114 = vsub.s32 0, %v113
    %v115 = vrot.slane %v110, %v114
    %v133 = vunpack.c.l.b16 %v94
    %v134 = vunpack.c.l.b16 %v95
    %v135 = vunpack.c.l.b16 %v96
    %v136 = vunpack.c.l.b16 %v97
    %v137 = vunpack.c.l.b16 %v98
    %v138 = vunpack.c.l.b16 %v99
    %v139 = vunpack.c.l.b16 %v100
    %v140 = vunpack.c.l.b16 %v101
    %v141 = vunpack.c.l.b16 %v102
    %v142 = vunpack.c.l.b16 %v103
    %v143 = vunpack.c.l.b16 %v104
    %v144 = vunpack.c.l.b16 %v105
    %v145 = vunpack.c.l.b16 %v106
    %v146 = vunpack.c.l.b16 %v107
    %v147 = vunpack.c.l.b16 %v108
    %v148 = vunpack.c.l.b16 %v109
    %v149 = vpack.c.b16 %v134, %v133
    %v150 = vpack.c.b16 %v136, %v135
    %v151 = vpack.c.b16 %v138, %v137
    %v152 = vpack.c.b16 %v140, %v139
    %v153 = vpack.c.b16 %v142, %v141
    %v154 = vpack.c.b16 %v144, %v143
    %v155 = vpack.c.b16 %v146, %v145
    %v156 = vpack.c.b16 %v148, %v147
    %165 = vmatprep.subr.bf16.mxu0 0
    %166 = vmatpush1.bf16.msra.mxu0 %v149
    %167 = vmatprep.subr.bf16.mxu0 0
    %168 = vmatpush1.bf16.msra.mxu0 %v150
    %169 = vmatprep.subr.bf16.mxu0 0
    %170 = vmatpush1.bf16.msra.mxu0 %v151
    %171 = vmatprep.subr.bf16.mxu0 0
    %172 = vmatpush1.bf16.msra.mxu0 %v152
    %173 = vmatprep.subr.bf16.mxu0 0
    %174 = vmatpush1.bf16.msra.mxu0 %v153
    %175 = vmatprep.subr.bf16.mxu0 0
    %176 = vmatpush1.bf16.msra.mxu0 %v154
    %177 = vmatprep.subr.bf16.mxu0 0
    %178 = vmatpush1.bf16.msra.mxu0 %v155
    %179 = vmatprep.subr.bf16.mxu0 0
    %180 = vmatpush1.bf16.msra.mxu0 %v156
    %181 = vmatprep.subr.bf16.mxu0 0
    %182 = vmatpush1.bf16.msra.mxu0 0
    %183 = vmatprep.subr.bf16.mxu0 0
    %184 = vmatpush1.bf16.msra.mxu0 0
    %185 = vmatprep.subr.bf16.mxu0 0
    %186 = vmatpush1.bf16.msra.mxu0 0
    %187 = vmatprep.subr.bf16.mxu0 0
    %188 = vmatpush1.bf16.msra.mxu0 0
    %189 = vmatprep.subr.bf16.mxu0 0
    %190 = vmatpush1.bf16.msra.mxu0 0
    %191 = vmatprep.subr.bf16.mxu0 0
    %192 = vmatpush1.bf16.msra.mxu0 0
    %193 = vmatprep.subr.bf16.mxu0 0
    %194 = vmatpush1.bf16.msra.mxu0 0
    %195 = vmatprep.subr.bf16.mxu0 0
    %196 = vmatpush1.bf16.msra.mxu0 0
    %197 = vmatprep.mubr.bf16.mxu0 0
    %198 = vmatmul.mubr.bf16.gmra.mrb[0].mxu0 %v93
    %v199 = vpop.f32.mrb[0].mxu0
    %v200 = vadd.f32 %v115, %v199
    %v201 = vpop.f32.mrb[0].mxu0
    %v202 = vpop.f32.mrb[0].mxu0
    %v203 = vpop.f32.mrb[0].mxu0
    %204 = vdwg.mxu0
    %v205 = vpack.c.bf16 %v200, %v200
    %206 = vst [vmem:[%s4] sm:$0xf] %v205
    // Predicated region
    $region22: #{actor_critic_forward.1} parent=1 // pred_check
      _
    $region23: #{actor_critic_forward.1} parent=1 // pred_check_branch
      %208 = sbr.rel (0) target = $region25
    $region24: #{actor_critic_forward.1} parent=1 // pred_region
      _
    $region25: #{actor_critic_forward.1} parent=1 // pred_fallthru
      _
    // Predicated region
    $region26: #{actor_critic_forward.1} parent=1 // pred_check
      _
    $region27: #{actor_critic_forward.1} parent=1 // pred_check_branch
      %210 = sbr.rel (0) target = $region29
    $region28: #{actor_critic_forward.1} parent=1 // pred_region
      _
    $region29: #{actor_critic_forward.1} parent=1 // pred_fallthru
      _
    %211 = vsyncpa [#allocation3], 1

</llo_original>
